<compile_context>
chip_gen: v7x
topology: tpu7x:2x2x1
jax: 0.10.0
libtpu: 0.0.40
codegen_flags: <defaults>
</compile_context>

<pallas_src>
import jax
import jax.numpy as jnp
from jax.experimental import pallas as pl
from jax.experimental.pallas import tpu as pltpu

LN_EPS = 1e-5


def _layernorm(v, gamma, beta):
    # v: (R, C) f32 ; gamma/beta: (1, C) f32
    mu = jnp.mean(v, axis=-1, keepdims=True)
    xc = v - mu
    var = jnp.mean(xc * xc, axis=-1, keepdims=True)
    inv = jax.lax.rsqrt(var + LN_EPS)
    return xc * inv * gamma + beta


def _gelu_tanh(x):
    # GELU, tanh approximation (matches nn.GELU(approximate='tanh'))
    c = 0.7978845608028654  # sqrt(2/pi)
    return 0.5 * x * (1.0 + jnp.tanh(c * (x + 0.044715 * x * x * x)))


def transformer_block_kernel(
    x_ref,                  # (TR, D)  activations (row tile, streamed)
    w1_ref, b1_ref,         # (D, F) bf16, (1, F) f32   (VMEM-resident)
    w2_ref, b2_ref,         # (F, D) bf16, (1, D) f32   (VMEM-resident)
    pre_g_ref, pre_b_ref,   # (1, D) f32
    pb_g_ref, pb_b_ref,     # (1, D) f32
    pm_g_ref, pm_b_ref,     # (1, D) f32
    o_ref,                  # (TR, D)
):
    x = x_ref[...].astype(jnp.float32)

    # ---- pre_norm (f32 VPU/EUP) ----
    branch_in = _layernorm(x, pre_g_ref[...], pre_b_ref[...])

    # ---- layer: Linear -> GELU -> Linear (bf16 MXU operands, f32 accumulation) ----
    h = jnp.dot(branch_in.astype(jnp.bfloat16), w1_ref[...],
                preferred_element_type=jnp.float32) + b1_ref[...]
    h = _gelu_tanh(h)
    out = jnp.dot(h.astype(jnp.bfloat16), w2_ref[...],
                  preferred_element_type=jnp.float32) + b2_ref[...]

    # ---- post_branch_norm ----
    out = _layernorm(out, pb_g_ref[...], pb_b_ref[...])

    # ---- residual ----
    x2 = x + out

    # ---- post_main_norm ----
    y = _layernorm(x2, pm_g_ref[...], pm_b_ref[...])

    o_ref[...] = y.astype(o_ref.dtype)


def transformer_block(x, params, *, row_tile=512):
    """x: [B, S, D] float32. params: dict of f32 weights (see init_params)."""
    B, S, D = x.shape
    F = params["w1"].shape[1]
    R = B * S

    # Row tile: as large as reasonable, multiple of 8 sublanes; pad rows to a multiple.
    TR = min(row_tile, R)
    TR = max(8, (TR // 8) * 8)
    R_pad = -(-R // TR) * TR
    x2d = x.reshape(R, D)
    if R_pad != R:
        x2d = jnp.pad(x2d, ((0, R_pad - R), (0, 0)))
    grid = (R_pad // TR,)

    # Weights in bf16 for the MXU; biases / LN params stay f32.
    w1 = params["w1"].astype(jnp.bfloat16)
    w2 = params["w2"].astype(jnp.bfloat16)

    row_spec = pl.BlockSpec((TR, D), lambda i: (i, 0))

    def resident(shape):
        # Constant index_map: same block every grid step -> stays VMEM-resident.
        return pl.BlockSpec(shape, lambda i: (0, 0))

    in_specs = [
        row_spec,                                 # x tile (streamed / double-buffered)
        resident((D, F)), resident((1, F)),       # w1 (bf16), b1
        resident((F, D)), resident((1, D)),       # w2 (bf16), b2
        resident((1, D)), resident((1, D)),       # pre_norm gamma/beta
        resident((1, D)), resident((1, D)),       # post_branch_norm gamma/beta
        resident((1, D)), resident((1, D)),       # post_main_norm gamma/beta
    ]

    # VMEM budget: resident weights (bf16) + params + double-buffered row tiles + the
    # (TR, F) GELU intermediate.  2x headroom, clamped to [16 MiB, 64 MiB] (v7x-safe).
    weight_bytes = 2 * D * F * 2 + (F + 7 * D) * 4
    tile_bytes = 2 * 2 * TR * D * 4               # in + out, double-buffered, f32
    scratch_bytes = TR * F * 4 + 2 * TR * D * 4   # h intermediate + temporaries
    vmem_limit = int(min(64 << 20,
                         max(16 << 20, 2 * (weight_bytes + tile_bytes + scratch_bytes))))

    cost = pl.CostEstimate(
        flops=4 * R_pad * D * F,                  # two matmuls, 2*R*D*F each
        transcendentals=R_pad * F,                # tanh in GELU
        bytes_accessed=2 * R_pad * D * 4 + weight_bytes,
    )

    out2d = pl.pallas_call(
        transformer_block_kernel,
        out_shape=jax.ShapeDtypeStruct((R_pad, D), x.dtype),
        grid=grid,
        in_specs=in_specs,
        out_specs=row_spec,
        compiler_params=pltpu.CompilerParams(
            dimension_semantics=("parallel",),    # shard row tiles across TCs (v7x)
            vmem_limit_bytes=vmem_limit,
        ),
        cost_estimate=cost,
    )(
        x2d,
        w1, params["b1"],
        w2, params["b2"],
        params["pre_g"], params["pre_b"],
        params["pb_g"], params["pb_b"],
        params["pm_g"], params["pm_b"],
    )
    # TODO(synk): for very large F on v7x (resident weights + (TR,F) scratch > 64 MiB),
    # add an F-axis accumulation grid with pl.when-gated epilogue.
    return out2d[:R].reshape(B, S, D)


def init_params(key, D, F):
    ks = jax.random.split(key, 8)
    scale1 = 1.0 / jnp.sqrt(D)
    scale2 = 1.0 / jnp.sqrt(F)
    return {
        # Linear weights stored as (in, out); equivalent to PyTorch weight.T
        "w1": jax.random.normal(ks[0], (D, F), jnp.float32) * scale1,
        "b1": jax.random.normal(ks[1], (1, F), jnp.float32) * 0.02,
        "w2": jax.random.normal(ks[2], (F, D), jnp.float32) * scale2,
        "b2": jax.random.normal(ks[3], (1, D), jnp.float32) * 0.02,
        # LayerNorm affine params (perturbed around 1 / 0)
        "pre_g": 1.0 + 0.1 * jax.random.normal(ks[4], (1, D), jnp.float32),
        "pre_b": 0.1 * jax.random.normal(ks[5], (1, D), jnp.float32),
        "pb_g": 1.0 + 0.1 * jax.random.normal(ks[6], (1, D), jnp.float32),
        "pb_b": jnp.zeros((1, D), jnp.float32),
        "pm_g": 1.0 + 0.1 * jax.random.normal(ks[7], (1, D), jnp.float32),
        "pm_b": jnp.zeros((1, D), jnp.float32),
    }


def _reference(x, p):
    """Pure-JAX f32 reference of the same forward (for a sanity check)."""
    xf = x.astype(jnp.float32)

    def ln(v, g, b):
        mu = jnp.mean(v, axis=-1, keepdims=True)
        var = jnp.mean((v - mu) ** 2, axis=-1, keepdims=True)
        return (v - mu) / jnp.sqrt(var + LN_EPS) * g.reshape(-1) + b.reshape(-1)

    h = ln(xf, p["pre_g"], p["pre_b"])
    h = h @ p["w1"] + p["b1"].reshape(-1)
    h = _gelu_tanh(h)
    out = h @ p["w2"] + p["b2"].reshape(-1)
    out = ln(out, p["pb_g"], p["pb_b"])
    x2 = xf + out
    return ln(x2, p["pm_g"], p["pm_b"])


if __name__ == "__main__":
    B, S, D, F = 2, 8, 32, 64
    key = jax.random.PRNGKey(0)
    kx, kp = jax.random.split(key)

    x = jax.random.normal(kx, (B, S, D), jnp.float32)
    params = init_params(kp, D, F)

    y = transformer_block(x, params)
    y = jax.block_until_ready(y)

    y_ref = _reference(x, params)
    assert y.shape == (B, S, D)
    # bf16 matmul operands (f32 accumulation) vs f32 reference -> relaxed tolerance.
    assert jnp.max(jnp.abs(y - y_ref)) < 3e-2, "mismatch vs reference"

    print("KERNEL_OK")
</pallas_src>

<mosaic_0001>
module attributes {stable_mosaic.version = 11 : i64} {
  func.func @transformer_block_kernel(%arg0: i32, %arg1: memref<16x32xf32, #tpu.memory_space<vmem>>, %arg2: memref<32x64xbf16, #tpu.memory_space<vmem>>, %arg3: memref<1x64xf32, #tpu.memory_space<vmem>>, %arg4: memref<64x32xbf16, #tpu.memory_space<vmem>>, %arg5: memref<1x32xf32, #tpu.memory_space<vmem>>, %arg6: memref<1x32xf32, #tpu.memory_space<vmem>>, %arg7: memref<1x32xf32, #tpu.memory_space<vmem>>, %arg8: memref<1x32xf32, #tpu.memory_space<vmem>>, %arg9: memref<1x32xf32, #tpu.memory_space<vmem>>, %arg10: memref<1x32xf32, #tpu.memory_space<vmem>>, %arg11: memref<1x32xf32, #tpu.memory_space<vmem>>, %arg12: memref<16x32xf32, #tpu.memory_space<vmem>>) attributes {dimension_semantics = [#tpu.dimension_semantics<parallel>], iteration_bounds = array<i64: 1>, scalar_prefetch = 0 : i64, scratch_operands = 0 : i64, tpu.core_type = #tpu.core_type<tc>, window_params = [{transform_indices = @transform_0, window_bounds = array<i64: 16, 32>}, {pipeline_mode = #tpu.pipeline_mode<synchronous>, transform_indices = @transform_1, window_bounds = array<i64: 32, 64>}, {pipeline_mode = #tpu.pipeline_mode<synchronous>, transform_indices = @transform_2, window_bounds = array<i64: 1, 64>}, {pipeline_mode = #tpu.pipeline_mode<synchronous>, transform_indices = @transform_3, window_bounds = array<i64: 64, 32>}, {pipeline_mode = #tpu.pipeline_mode<synchronous>, transform_indices = @transform_4, window_bounds = array<i64: 1, 32>}, {pipeline_mode = #tpu.pipeline_mode<synchronous>, transform_indices = @transform_5, window_bounds = array<i64: 1, 32>}, {pipeline_mode = #tpu.pipeline_mode<synchronous>, transform_indices = @transform_6, window_bounds = array<i64: 1, 32>}, {pipeline_mode = #tpu.pipeline_mode<synchronous>, transform_indices = @transform_7, window_bounds = array<i64: 1, 32>}, {pipeline_mode = #tpu.pipeline_mode<synchronous>, transform_indices = @transform_8, window_bounds = array<i64: 1, 32>}, {pipeline_mode = #tpu.pipeline_mode<synchronous>, transform_indices = @transform_9, window_bounds = array<i64: 1, 32>}, {pipeline_mode = #tpu.pipeline_mode<synchronous>, transform_indices = @transform_10, window_bounds = array<i64: 1, 32>}, {transform_indices = @transform_11, window_bounds = array<i64: 16, 32>}]} {
    %c0 = arith.constant 0 : index
    %c0_0 = arith.constant 0 : index
    %0 = vector.load %arg1[%c0, %c0_0] : memref<16x32xf32, #tpu.memory_space<vmem>>, vector<16x32xf32>
    %c0_1 = arith.constant 0 : index
    %c0_2 = arith.constant 0 : index
    %1 = vector.load %arg6[%c0_1, %c0_2] : memref<1x32xf32, #tpu.memory_space<vmem>>, vector<1x32xf32>
    %c0_3 = arith.constant 0 : index
    %c0_4 = arith.constant 0 : index
    %2 = vector.load %arg7[%c0_3, %c0_4] : memref<1x32xf32, #tpu.memory_space<vmem>>, vector<1x32xf32>
    %cst = arith.constant dense<0.000000e+00> : vector<16xf32>
    %3 = vector.multi_reduction <add>, %0, %cst [1] : vector<16x32xf32> to vector<16xf32>
    %4 = vector.shape_cast %3 : vector<16xf32> to vector<16x1xf32>
    %cst_5 = arith.constant 3.200000e+01 : f32
    %5 = vector.broadcast %cst_5 : f32 to vector<16x1xf32>
    %6 = arith.divf %4, %5 : vector<16x1xf32>
    %7 = vector.broadcast %6 : vector<16x1xf32> to vector<16x32xf32>
    %8 = arith.subf %0, %7 : vector<16x32xf32>
    %9 = arith.mulf %8, %8 : vector<16x32xf32>
    %cst_6 = arith.constant dense<0.000000e+00> : vector<16xf32>
    %10 = vector.multi_reduction <add>, %9, %cst_6 [1] : vector<16x32xf32> to vector<16xf32>
    %11 = vector.shape_cast %10 : vector<16xf32> to vector<16x1xf32>
    %cst_7 = arith.constant 3.200000e+01 : f32
    %12 = vector.broadcast %cst_7 : f32 to vector<16x1xf32>
    %13 = arith.divf %11, %12 : vector<16x1xf32>
    %cst_8 = arith.constant 9.99999974E-6 : f32
    %14 = vector.broadcast %cst_8 : f32 to vector<16x1xf32>
    %15 = arith.addf %13, %14 : vector<16x1xf32>
    %16 = math.rsqrt %15 : vector<16x1xf32>
    %17 = vector.broadcast %16 : vector<16x1xf32> to vector<16x32xf32>
    %18 = arith.mulf %8, %17 : vector<16x32xf32>
    %19 = vector.broadcast %1 : vector<1x32xf32> to vector<16x32xf32>
    %20 = arith.mulf %18, %19 : vector<16x32xf32>
    %21 = vector.broadcast %2 : vector<1x32xf32> to vector<16x32xf32>
    %22 = arith.addf %20, %21 : vector<16x32xf32>
    %23 = arith.truncf %22 : vector<16x32xf32> to vector<16x32xbf16>
    %c0_9 = arith.constant 0 : index
    %c0_10 = arith.constant 0 : index
    %24 = vector.load %arg2[%c0_9, %c0_10] : memref<32x64xbf16, #tpu.memory_space<vmem>>, vector<32x64xbf16>
    %cst_11 = arith.constant dense<0.000000e+00> : vector<16x64xf32>
    %25 = tpu.matmul %23, %24, %cst_11 {dimension_numbers = #tpu.dot_dimension_numbers<[1], [0], [0], [1], [0, 0, 1, 1], [], []>} : vector<16x32xbf16>, vector<32x64xbf16>, vector<16x64xf32> -> vector<16x64xf32>
    %c0_12 = arith.constant 0 : index
    %c0_13 = arith.constant 0 : index
    %26 = vector.load %arg3[%c0_12, %c0_13] : memref<1x64xf32, #tpu.memory_space<vmem>>, vector<1x64xf32>
    %27 = vector.broadcast %26 : vector<1x64xf32> to vector<16x64xf32>
    %28 = arith.addf %25, %27 : vector<16x64xf32>
    %cst_14 = arith.constant 5.000000e-01 : f32
    %29 = vector.broadcast %cst_14 : f32 to vector<16x64xf32>
    %30 = arith.mulf %29, %28 : vector<16x64xf32>
    %cst_15 = arith.constant 4.471500e-02 : f32
    %31 = vector.broadcast %cst_15 : f32 to vector<16x64xf32>
    %32 = arith.mulf %31, %28 : vector<16x64xf32>
    %33 = arith.mulf %32, %28 : vector<16x64xf32>
    %34 = arith.mulf %33, %28 : vector<16x64xf32>
    %35 = arith.addf %28, %34 : vector<16x64xf32>
    %cst_16 = arith.constant 0.797884583 : f32
    %36 = vector.broadcast %cst_16 : f32 to vector<16x64xf32>
    %37 = arith.mulf %36, %35 : vector<16x64xf32>
    %38 = math.tanh %37 : vector<16x64xf32>
    %cst_17 = arith.constant 1.000000e+00 : f32
    %39 = vector.broadcast %cst_17 : f32 to vector<16x64xf32>
    %40 = arith.addf %39, %38 : vector<16x64xf32>
    %41 = arith.mulf %30, %40 : vector<16x64xf32>
    %42 = arith.truncf %41 : vector<16x64xf32> to vector<16x64xbf16>
    %c0_18 = arith.constant 0 : index
    %c0_19 = arith.constant 0 : index
    %43 = vector.load %arg4[%c0_18, %c0_19] : memref<64x32xbf16, #tpu.memory_space<vmem>>, vector<64x32xbf16>
    %cst_20 = arith.constant dense<0.000000e+00> : vector<16x32xf32>
    %44 = tpu.matmul %42, %43, %cst_20 {dimension_numbers = #tpu.dot_dimension_numbers<[1], [0], [0], [1], [0, 0, 1, 1], [], []>} : vector<16x64xbf16>, vector<64x32xbf16>, vector<16x32xf32> -> vector<16x32xf32>
    %c0_21 = arith.constant 0 : index
    %c0_22 = arith.constant 0 : index
    %45 = vector.load %arg5[%c0_21, %c0_22] : memref<1x32xf32, #tpu.memory_space<vmem>>, vector<1x32xf32>
    %46 = vector.broadcast %45 : vector<1x32xf32> to vector<16x32xf32>
    %47 = arith.addf %44, %46 : vector<16x32xf32>
    %c0_23 = arith.constant 0 : index
    %c0_24 = arith.constant 0 : index
    %48 = vector.load %arg8[%c0_23, %c0_24] : memref<1x32xf32, #tpu.memory_space<vmem>>, vector<1x32xf32>
    %c0_25 = arith.constant 0 : index
    %c0_26 = arith.constant 0 : index
    %49 = vector.load %arg9[%c0_25, %c0_26] : memref<1x32xf32, #tpu.memory_space<vmem>>, vector<1x32xf32>
    %cst_27 = arith.constant dense<0.000000e+00> : vector<16xf32>
    %50 = vector.multi_reduction <add>, %47, %cst_27 [1] : vector<16x32xf32> to vector<16xf32>
    %51 = vector.shape_cast %50 : vector<16xf32> to vector<16x1xf32>
    %cst_28 = arith.constant 3.200000e+01 : f32
    %52 = vector.broadcast %cst_28 : f32 to vector<16x1xf32>
    %53 = arith.divf %51, %52 : vector<16x1xf32>
    %54 = vector.broadcast %53 : vector<16x1xf32> to vector<16x32xf32>
    %55 = arith.subf %47, %54 : vector<16x32xf32>
    %56 = arith.mulf %55, %55 : vector<16x32xf32>
    %cst_29 = arith.constant dense<0.000000e+00> : vector<16xf32>
    %57 = vector.multi_reduction <add>, %56, %cst_29 [1] : vector<16x32xf32> to vector<16xf32>
    %58 = vector.shape_cast %57 : vector<16xf32> to vector<16x1xf32>
    %cst_30 = arith.constant 3.200000e+01 : f32
    %59 = vector.broadcast %cst_30 : f32 to vector<16x1xf32>
    %60 = arith.divf %58, %59 : vector<16x1xf32>
    %cst_31 = arith.constant 9.99999974E-6 : f32
    %61 = vector.broadcast %cst_31 : f32 to vector<16x1xf32>
    %62 = arith.addf %60, %61 : vector<16x1xf32>
    %63 = math.rsqrt %62 : vector<16x1xf32>
    %64 = vector.broadcast %63 : vector<16x1xf32> to vector<16x32xf32>
    %65 = arith.mulf %55, %64 : vector<16x32xf32>
    %66 = vector.broadcast %48 : vector<1x32xf32> to vector<16x32xf32>
    %67 = arith.mulf %65, %66 : vector<16x32xf32>
    %68 = vector.broadcast %49 : vector<1x32xf32> to vector<16x32xf32>
    %69 = arith.addf %67, %68 : vector<16x32xf32>
    %70 = arith.addf %0, %69 : vector<16x32xf32>
    %c0_32 = arith.constant 0 : index
    %c0_33 = arith.constant 0 : index
    %71 = vector.load %arg10[%c0_32, %c0_33] : memref<1x32xf32, #tpu.memory_space<vmem>>, vector<1x32xf32>
    %c0_34 = arith.constant 0 : index
    %c0_35 = arith.constant 0 : index
    %72 = vector.load %arg11[%c0_34, %c0_35] : memref<1x32xf32, #tpu.memory_space<vmem>>, vector<1x32xf32>
    %cst_36 = arith.constant dense<0.000000e+00> : vector<16xf32>
    %73 = vector.multi_reduction <add>, %70, %cst_36 [1] : vector<16x32xf32> to vector<16xf32>
    %74 = vector.shape_cast %73 : vector<16xf32> to vector<16x1xf32>
    %cst_37 = arith.constant 3.200000e+01 : f32
    %75 = vector.broadcast %cst_37 : f32 to vector<16x1xf32>
    %76 = arith.divf %74, %75 : vector<16x1xf32>
    %77 = vector.broadcast %76 : vector<16x1xf32> to vector<16x32xf32>
    %78 = arith.subf %70, %77 : vector<16x32xf32>
    %79 = arith.mulf %78, %78 : vector<16x32xf32>
    %cst_38 = arith.constant dense<0.000000e+00> : vector<16xf32>
    %80 = vector.multi_reduction <add>, %79, %cst_38 [1] : vector<16x32xf32> to vector<16xf32>
    %81 = vector.shape_cast %80 : vector<16xf32> to vector<16x1xf32>
    %cst_39 = arith.constant 3.200000e+01 : f32
    %82 = vector.broadcast %cst_39 : f32 to vector<16x1xf32>
    %83 = arith.divf %81, %82 : vector<16x1xf32>
    %cst_40 = arith.constant 9.99999974E-6 : f32
    %84 = vector.broadcast %cst_40 : f32 to vector<16x1xf32>
    %85 = arith.addf %83, %84 : vector<16x1xf32>
    %86 = math.rsqrt %85 : vector<16x1xf32>
    %87 = vector.broadcast %86 : vector<16x1xf32> to vector<16x32xf32>
    %88 = arith.mulf %78, %87 : vector<16x32xf32>
    %89 = vector.broadcast %71 : vector<1x32xf32> to vector<16x32xf32>
    %90 = arith.mulf %88, %89 : vector<16x32xf32>
    %91 = vector.broadcast %72 : vector<1x32xf32> to vector<16x32xf32>
    %92 = arith.addf %90, %91 : vector<16x32xf32>
    %c0_41 = arith.constant 0 : index
    %c0_42 = arith.constant 0 : index
    %93 = vector.load %arg12[%c0_41, %c0_42] : memref<16x32xf32, #tpu.memory_space<vmem>>, vector<16x32xf32>
    tpu.vector_store %arg12[%c0_41, %c0_42], %92 {strides = array<i32>} : memref<16x32xf32, #tpu.memory_space<vmem>>, vector<16x32xf32>,
    return
  }
  func.func @transform_0(%arg0: i32) -> (i32, i32) {
    %c0_i32 = arith.constant 0 : i32
    %c0_i32_0 = arith.constant 0 : i32
    return %arg0, %c0_i32 : i32, i32
  }
  func.func @transform_1(%arg0: i32) -> (i32, i32) {
    %c0_i32 = arith.constant 0 : i32
    %c0_i32_0 = arith.constant 0 : i32
    %c0_i32_1 = arith.constant 0 : i32
    return %c0_i32, %c0_i32_0 : i32, i32
  }
  func.func @transform_2(%arg0: i32) -> (i32, i32) {
    %c0_i32 = arith.constant 0 : i32
    %c0_i32_0 = arith.constant 0 : i32
    %c0_i32_1 = arith.constant 0 : i32
    return %c0_i32, %c0_i32_0 : i32, i32
  }
  func.func @transform_3(%arg0: i32) -> (i32, i32) {
    %c0_i32 = arith.constant 0 : i32
    %c0_i32_0 = arith.constant 0 : i32
    %c0_i32_1 = arith.constant 0 : i32
    return %c0_i32, %c0_i32_0 : i32, i32
  }
  func.func @transform_4(%arg0: i32) -> (i32, i32) {
    %c0_i32 = arith.constant 0 : i32
    %c0_i32_0 = arith.constant 0 : i32
    %c0_i32_1 = arith.constant 0 : i32
    return %c0_i32, %c0_i32_0 : i32, i32
  }
  func.func @transform_5(%arg0: i32) -> (i32, i32) {
    %c0_i32 = arith.constant 0 : i32
    %c0_i32_0 = arith.constant 0 : i32
    %c0_i32_1 = arith.constant 0 : i32
    return %c0_i32, %c0_i32_0 : i32, i32
  }
  func.func @transform_6(%arg0: i32) -> (i32, i32) {
    %c0_i32 = arith.constant 0 : i32
    %c0_i32_0 = arith.constant 0 : i32
    %c0_i32_1 = arith.constant 0 : i32
    return %c0_i32, %c0_i32_0 : i32, i32
  }
  func.func @transform_7(%arg0: i32) -> (i32, i32) {
    %c0_i32 = arith.constant 0 : i32
    %c0_i32_0 = arith.constant 0 : i32
    %c0_i32_1 = arith.constant 0 : i32
    return %c0_i32, %c0_i32_0 : i32, i32
  }
  func.func @transform_8(%arg0: i32) -> (i32, i32) {
    %c0_i32 = arith.constant 0 : i32
    %c0_i32_0 = arith.constant 0 : i32
    %c0_i32_1 = arith.constant 0 : i32
    return %c0_i32, %c0_i32_0 : i32, i32
  }
  func.func @transform_9(%arg0: i32) -> (i32, i32) {
    %c0_i32 = arith.constant 0 : i32
    %c0_i32_0 = arith.constant 0 : i32
    %c0_i32_1 = arith.constant 0 : i32
    return %c0_i32, %c0_i32_0 : i32, i32
  }
  func.func @transform_10(%arg0: i32) -> (i32, i32) {
    %c0_i32 = arith.constant 0 : i32
    %c0_i32_0 = arith.constant 0 : i32
    %c0_i32_1 = arith.constant 0 : i32
    return %c0_i32, %c0_i32_0 : i32, i32
  }
  func.func @transform_11(%arg0: i32) -> (i32, i32) {
    %c0_i32 = arith.constant 0 : i32
    %c0_i32_0 = arith.constant 0 : i32
    return %arg0, %c0_i32 : i32, i32
  }
}

</mosaic_0001>

<llo_original>
// kernel: tpu_custom_call.1
$region0: #{tpu_custom_call.1}
  #allocation0 [shape = 'u32[]', space=smem, size = 0x4, offset = 0x4, fixed_abs, tag = 'smem constant byte address 0x4 - core index']
  #allocation1 [shape = 'u32[144,128]{1,0:T(1,128)}', space=vmem, size = 0x12000, scoped, tag = 'internal scratch']
  %s0 = inlined_call_operand.vmem [shape: f32[16,32], index: 0, kind: input, shape index: {}]
  %s1 = inlined_call_operand.vmem [shape: bf16[32,64], index: 1, kind: input, shape index: {}]
  %s2 = inlined_call_operand.vmem [shape: f32[1,64], index: 2, kind: input, shape index: {}]
  %s3 = inlined_call_operand.vmem [shape: bf16[64,32], index: 3, kind: input, shape index: {}]
  %s4 = inlined_call_operand.vmem [shape: f32[1,32], index: 4, kind: input, shape index: {}]
  %s5 = inlined_call_operand.vmem [shape: f32[1,32], index: 5, kind: input, shape index: {}]
  %s6 = inlined_call_operand.vmem [shape: f32[1,32], index: 6, kind: input, shape index: {}]
  %s7 = inlined_call_operand.vmem [shape: f32[1,32], index: 7, kind: input, shape index: {}]
  %s8 = inlined_call_operand.vmem [shape: f32[1,32], index: 8, kind: input, shape index: {}]
  %s9 = inlined_call_operand.vmem [shape: f32[1,32], index: 9, kind: input, shape index: {}]
  %s10 = inlined_call_operand.vmem [shape: f32[1,32], index: 10, kind: input, shape index: {}]
  %s11 = inlined_call_operand.hbm [shape: f32[16,32], index: 11, kind: output, shape index: {}]
  %s12 = sld [smem:[#allocation0]]
  $region54: #{tpu_custom_call.1} parent=0
    _
  %s14 = ssub.s32 1, %s12
  %s15 = scalar_select 0, %s14, %s12
  $region1: #{tpu_custom_call.1} parent=0
    #allocation2 [shape = 'u8[8192]{0}', space=vmem, size = 0x2000, scoped, tag = 'output window, operand 0, single buffered']
    #allocation3 [shape = 's32[1]{0}', space=sflag, size = 0x4, scoped, tag = 'scoped memory for tpu_custom_call.1']
    %16 = vsyncpa [#allocation3], 0
    // Predicated region
    $region2: #{tpu_custom_call.1} parent=1 // pred_check
      _
    $region3: #{tpu_custom_call.1} parent=1 // pred_check_branch
      %18 = sbr.rel (0) target = $region5
    $region4: #{tpu_custom_call.1} parent=1 // pred_region
      _
    $region5: #{tpu_custom_call.1} parent=1 // pred_fallthru
      _
    // Predicated region
    $region6: #{tpu_custom_call.1} parent=1 // pred_check
      _
    $region7: #{tpu_custom_call.1} parent=1 // pred_check_branch
      %20 = sbr.rel (0) target = $region9
    $region8: #{tpu_custom_call.1} parent=1 // pred_region
      _
    $region9: #{tpu_custom_call.1} parent=1 // pred_fallthru
      _
    // Predicated region
    $region10: #{tpu_custom_call.1} parent=1 // pred_check
      _
    $region11: #{tpu_custom_call.1} parent=1 // pred_check_branch
      %22 = sbr.rel (0) target = $region13
    $region12: #{tpu_custom_call.1} parent=1 // pred_region
      _
    $region13: #{tpu_custom_call.1} parent=1 // pred_fallthru
      _
    // Predicated region
    $region14: #{tpu_custom_call.1} parent=1 // pred_check
      _
    $region15: #{tpu_custom_call.1} parent=1 // pred_check_branch
      %24 = sbr.rel (0) target = $region17
    $region16: #{tpu_custom_call.1} parent=1 // pred_region
      _
    $region17: #{tpu_custom_call.1} parent=1 // pred_fallthru
      _
    // Predicated region
    $region18: #{tpu_custom_call.1} parent=1 // pred_check
      _
    $region19: #{tpu_custom_call.1} parent=1 // pred_check_branch
      %26 = sbr.rel (0) target = $region21
    $region20: #{tpu_custom_call.1} parent=1 // pred_region
      _
    $region21: #{tpu_custom_call.1} parent=1 // pred_fallthru
      _
    // Predicated region
    $region22: #{tpu_custom_call.1} parent=1 // pred_check
      _
    $region23: #{tpu_custom_call.1} parent=1 // pred_check_branch
      %28 = sbr.rel (0) target = $region25
    $region24: #{tpu_custom_call.1} parent=1 // pred_region
      _
    $region25: #{tpu_custom_call.1} parent=1 // pred_fallthru
      _
    // Predicated region
    $region26: #{tpu_custom_call.1} parent=1 // pred_check
      _
    $region27: #{tpu_custom_call.1} parent=1 // pred_check_branch
      %30 = sbr.rel (0) target = $region29
    $region28: #{tpu_custom_call.1} parent=1 // pred_region
      _
    $region29: #{tpu_custom_call.1} parent=1 // pred_fallthru
      _
    // Predicated region
    $region30: #{tpu_custom_call.1} parent=1 // pred_check
      _
    $region31: #{tpu_custom_call.1} parent=1 // pred_check_branch
      %32 = sbr.rel (0) target = $region33
    $region32: #{tpu_custom_call.1} parent=1 // pred_region
      _
    $region33: #{tpu_custom_call.1} parent=1 // pred_fallthru
      _
    // Predicated region
    $region34: #{tpu_custom_call.1} parent=1 // pred_check
      _
    $region35: #{tpu_custom_call.1} parent=1 // pred_check_branch
      %34 = sbr.rel (0) target = $region37
    $region36: #{tpu_custom_call.1} parent=1 // pred_region
      _
    $region37: #{tpu_custom_call.1} parent=1 // pred_fallthru
      _
    // Predicated region
    $region38: #{tpu_custom_call.1} parent=1 // pred_check
      _
    $region39: #{tpu_custom_call.1} parent=1 // pred_check_branch
      %36 = sbr.rel (0) target = $region41
    $region40: #{tpu_custom_call.1} parent=1 // pred_region
      _
    $region41: #{tpu_custom_call.1} parent=1 // pred_fallthru
      _
    // Predicated region
    $region42: #{tpu_custom_call.1} parent=1 // pred_check
      _
    $region43: #{tpu_custom_call.1} parent=1 // pred_check_branch
      %38 = sbr.rel (0) target = $region45
    $region44: #{tpu_custom_call.1} parent=1 // pred_region
      _
    $region45: #{tpu_custom_call.1} parent=1 // pred_fallthru
      _
    %v40 = vld [vmem:[%s0] sm:$0xff]
    %v41 = vld [vmem:[%s0 + $0x8] sm:$0xff]
    %v42 = vld [vmem:[%s5] sm:$0x1]
    %v43 = vld [vmem:[%s6] sm:$0x1]
    %vm44 = vcmask 261120
    %v45 = vsel %vm44, %v40, 0.0
    %46 = vadd.xlane.f32.xlu0 %v45
    %v47 = vpop.xlane.xlu0 %46
    %v48 = vsel %vm44, %v41, 0.0
    %49 = vadd.xlane.f32.xlu0 %v48
    %v50 = vpop.xlane.xlu0 %49
    %v51 = vrcp.pop 32.0
    %v52 = vmul.f32 %v47, %v51
    %v53 = vmul.f32 %v50, %v51
    %v54 = vsub.f32 %v40, %v52
    %v55 = vsub.f32 %v41, %v53
    %v56 = vmul.f32 %v54, %v54
    %v57 = vmul.f32 %v55, %v55
    %v58 = vsel %vm44, %v56, 0.0
    %59 = vadd.xlane.f32.xlu0 %v58
    %v60 = vpop.xlane.xlu0 %59
    %v61 = vsel %vm44, %v57, 0.0
    %62 = vadd.xlane.f32.xlu0 %v61
    %v63 = vpop.xlane.xlu0 %62
    %v64 = vmul.f32 %v60, %v51
    %v65 = vmul.f32 %v63, %v51
    %v66 = vadd.f32 %v64, 1e-05
    %v67 = vadd.f32 %v65, 1e-05
    %v68 = vrsqrt.pop %v66
    %v69 = vrsqrt.pop %v67
    %v70 = vmul.f32 %v54, %v68
    %v71 = vmul.f32 %v55, %v69
    %v73 = vlaneseq
    %v74 = vshrl.u32 %v73, 7
    %v75 = vsub.s32 0, %v74
    %v76 = vrot.slane %v42, %v75
    %v78 = vmul.f32 %v70, %v76
    %v79 = vmul.f32 %v71, %v76
    %v81 = vlaneseq
    %v82 = vshrl.u32 %v81, 7
    %v83 = vsub.s32 0, %v82
    %v84 = vrot.slane %v43, %v83
    %v86 = vadd.f32 %v78, %v84
    %v87 = vadd.f32 %v79, %v84
    %v88 = vpack.c.bf16 %v87, %v86
    %v89 = vld [vmem:[%s1] sm:$0xf]
    %v90 = vld [vmem:[%s1 + $0x4] sm:$0xf]
    %v91 = vld [vmem:[%s1 + $0x8] sm:$0xf]
    %v92 = vld [vmem:[%s1 + $0xc] sm:$0xf]
    %v93 = vld [vmem:[%s2] sm:$0x1]
    %v95 = vlaneseq
    %v96 = vshrl.u32 %v95, 7
    %v97 = vsub.s32 0, %v96
    %v98 = vrot.slane %v93, %v97
    %v104 = vunpack.c.l.b16 %v89
    %v105 = vunpack.c.l.b16 %v90
    %v106 = vunpack.c.l.b16 %v91
    %v107 = vunpack.c.l.b16 %v92
    %v108 = vpack.c.b16 %v105, %v104
    %v109 = vpack.c.b16 %v107, %v106
    %v113 = vsel %vm44, %v88, 0
    %115 = vmatprep.subr.bf16.mxu0 0
    %116 = vmatpush1.bf16.msra.mxu0 %v108
    %117 = vmatprep.subr.bf16.mxu0 0
    %118 = vmatpush1.bf16.msra.mxu0 %v109
    %119 = vmatprep.subr.bf16.mxu0 0
    %120 = vmatpush1.bf16.msra.mxu0 0
    %121 = vmatprep.subr.bf16.mxu0 0
    %122 = vmatpush1.bf16.msra.mxu0 0
    %123 = vmatprep.subr.bf16.mxu0 0
    %124 = vmatpush1.bf16.msra.mxu0 0
    %125 = vmatprep.subr.bf16.mxu0 0
    %126 = vmatpush1.bf16.msra.mxu0 0
    %127 = vmatprep.subr.bf16.mxu0 0
    %128 = vmatpush1.bf16.msra.mxu0 0
    %129 = vmatprep.subr.bf16.mxu0 0
    %130 = vmatpush1.bf16.msra.mxu0 0
    %131 = vmatprep.subr.bf16.mxu0 0
    %132 = vmatpush1.bf16.msra.mxu0 0
    %133 = vmatprep.subr.bf16.mxu0 0
    %134 = vmatpush1.bf16.msra.mxu0 0
    %135 = vmatprep.subr.bf16.mxu0 0
    %136 = vmatpush1.bf16.msra.mxu0 0
    %137 = vmatprep.subr.bf16.mxu0 0
    %138 = vmatpush1.bf16.msra.mxu0 0
    %139 = vmatprep.subr.bf16.mxu0 0
    %140 = vmatpush1.bf16.msra.mxu0 0
    %141 = vmatprep.subr.bf16.mxu0 0
    %142 = vmatpush1.bf16.msra.mxu0 0
    %143 = vmatprep.subr.bf16.mxu0 0
    %144 = vmatpush1.bf16.msra.mxu0 0
    %145 = vmatprep.subr.bf16.mxu0 0
    %146 = vmatpush1.bf16.msra.mxu0 0
    %147 = vmatprep.mubr.bf16.mxu0 0
    %148 = vmatmul.mubr.bf16.gmra.mrb[0].mxu0 %v113
    %v149 = vpop.f32.mrb[0].mxu0
    %v150 = vadd.f32 %v98, %v149
    %v151 = vpop.f32.mrb[0].mxu0
    %v152 = vpop.f32.mrb[0].mxu0
    %v153 = vadd.f32 %v98, %v152
    %v154 = vpop.f32.mrb[0].mxu0
    %155 = vdwg.mxu0
    %v156 = vmul.f32 %v150, 0.5
    %v157 = vmul.f32 %v153, 0.5
    %v158 = vmul.f32 %v150, 0.044715
    %v159 = vmul.f32 %v153, 0.044715
    %v160 = vmul.f32 %v158, %v150
    %v161 = vmul.f32 %v159, %v153
    %v162 = vmul.f32 %v160, %v150
    %v163 = vmul.f32 %v161, %v153
    %v164 = vadd.f32 %v150, %v162
    %v165 = vadd.f32 %v153, %v163
    %v166 = vmul.f32 %v164, 0.7978846
    %v167 = vmul.f32 %v165, 0.7978846
    %v168 = vtanh.pop %v166
    %v169 = vtanh.pop %v167
    %v170 = vadd.f32 %v168, 1.0
    %v171 = vadd.f32 %v169, 1.0
    %v172 = vmul.f32 %v156, %v170
    %v173 = vmul.f32 %v157, %v171
    %v174 = vpack.c.bf16 %v173, %v172
    %v175 = vld [vmem:[%s3] sm:$0xf]
    %v176 = vld [vmem:[%s3 + $0x4] sm:$0xf]
    %v177 = vld [vmem:[%s3 + $0x8] sm:$0xf]
    %v178 = vld [vmem:[%s3 + $0xc] sm:$0xf]
    %v179 = vld [vmem:[%s3 + $0x10] sm:$0xf]
    %v180 = vld [vmem:[%s3 + $0x14] sm:$0xf]
    %v181 = vld [vmem:[%s3 + $0x18] sm:$0xf]
    %v182 = vld [vmem:[%s3 + $0x1c] sm:$0xf]
    %v183 = vld [vmem:[%s4] sm:$0x1]
    %v185 = vlaneseq
    %v186 = vshrl.u32 %v185, 7
    %v187 = vsub.s32 0, %v186
    %v188 = vrot.slane %v183, %v187
    %v198 = vunpack.c.l.b16 %v175
    %v199 = vunpack.c.l.b16 %v176
    %v200 = vunpack.c.l.b16 %v177
    %v201 = vunpack.c.l.b16 %v178
    %v202 = vunpack.c.l.b16 %v179
    %v203 = vunpack.c.l.b16 %v180
    %v204 = vunpack.c.l.b16 %v181
    %v205 = vunpack.c.l.b16 %v182
    %v206 = vpack.c.b16 %v199, %v198
    %v207 = vpack.c.b16 %v201, %v200
    %v208 = vpack.c.b16 %v203, %v202
    %v209 = vpack.c.b16 %v205, %v204
    %vm214 = vcmask 523264
    %v216 = vsel %vm214, %v174, 0
    %218 = vmatprep.subr.bf16.mxu0 0
    %219 = vmatpush1.bf16.msra.mxu0 %v206
    %220 = vmatprep.subr.bf16.mxu0 0
    %221 = vmatpush1.bf16.msra.mxu0 %v207
    %222 = vmatprep.subr.bf16.mxu0 0
    %223 = vmatpush1.bf16.msra.mxu0 %v208
    %224 = vmatprep.subr.bf16.mxu0 0
    %225 = vmatpush1.bf16.msra.mxu0 %v209
    %226 = vmatprep.subr.bf16.mxu0 0
    %227 = vmatpush1.bf16.msra.mxu0 0
    %228 = vmatprep.subr.bf16.mxu0 0
    %229 = vmatpush1.bf16.msra.mxu0 0
    %230 = vmatprep.subr.bf16.mxu0 0
    %231 = vmatpush1.bf16.msra.mxu0 0
    %232 = vmatprep.subr.bf16.mxu0 0
    %233 = vmatpush1.bf16.msra.mxu0 0
    %234 = vmatprep.subr.bf16.mxu0 0
    %235 = vmatpush1.bf16.msra.mxu0 0
    %236 = vmatprep.subr.bf16.mxu0 0
    %237 = vmatpush1.bf16.msra.mxu0 0
    %238 = vmatprep.subr.bf16.mxu0 0
    %239 = vmatpush1.bf16.msra.mxu0 0
    %240 = vmatprep.subr.bf16.mxu0 0
    %241 = vmatpush1.bf16.msra.mxu0 0
    %242 = vmatprep.subr.bf16.mxu0 0
    %243 = vmatpush1.bf16.msra.mxu0 0
    %244 = vmatprep.subr.bf16.mxu0 0
    %245 = vmatpush1.bf16.msra.mxu0 0
    %246 = vmatprep.subr.bf16.mxu0 0
    %247 = vmatpush1.bf16.msra.mxu0 0
    %248 = vmatprep.subr.bf16.mxu0 0
    %249 = vmatpush1.bf16.msra.mxu0 0
    %250 = vmatprep.mubr.bf16.mxu0 0
    %251 = vmatmul.mubr.bf16.gmra.mrb[0].mxu0 %v216
    %v252 = vpop.f32.mrb[0].mxu0
    %v253 = vadd.f32 %v188, %v252
    %v254 = vpop.f32.mrb[0].mxu0
    %v255 = vpop.f32.mrb[0].mxu0
    %v256 = vadd.f32 %v188, %v255
    %v257 = vpop.f32.mrb[0].mxu0
    %258 = vdwg.mxu0
    %v259 = vld [vmem:[%s7] sm:$0x1]
    %v260 = vld [vmem:[%s8] sm:$0x1]
    %v261 = vsel %vm44, %v253, 0.0
    %262 = vadd.xlane.f32.xlu0 %v261
    %v263 = vpop.xlane.xlu0 %262
    %v264 = vsel %vm44, %v256, 0.0
    %265 = vadd.xlane.f32.xlu0 %v264
    %v266 = vpop.xlane.xlu0 %265
    %v267 = vmul.f32 %v263, %v51
    %v268 = vmul.f32 %v266, %v51
    %v269 = vsub.f32 %v253, %v267
    %v270 = vsub.f32 %v256, %v268
    %v271 = vmul.f32 %v269, %v269
    %v272 = vmul.f32 %v270, %v270
    %v273 = vsel %vm44, %v271, 0.0
    %274 = vadd.xlane.f32.xlu0 %v273
    %v275 = vpop.xlane.xlu0 %274
    %v276 = vsel %vm44, %v272, 0.0
    %277 = vadd.xlane.f32.xlu0 %v276
    %v278 = vpop.xlane.xlu0 %277
    %v279 = vmul.f32 %v275, %v51
    %v280 = vmul.f32 %v278, %v51
    %v281 = vadd.f32 %v279, 1e-05
    %v282 = vadd.f32 %v280, 1e-05
    %v283 = vrsqrt.pop %v281
    %v284 = vrsqrt.pop %v282
    %v285 = vmul.f32 %v269, %v283
    %v286 = vmul.f32 %v270, %v284
    %v288 = vlaneseq
    %v289 = vshrl.u32 %v288, 7
    %v290 = vsub.s32 0, %v289
    %v291 = vrot.slane %v259, %v290
    %v293 = vmul.f32 %v285, %v291
    %v294 = vmul.f32 %v286, %v291
    %v296 = vlaneseq
    %v297 = vshrl.u32 %v296, 7
    %v298 = vsub.s32 0, %v297
    %v299 = vrot.slane %v260, %v298
    %v301 = vadd.f32 %v293, %v299
    %v302 = vadd.f32 %v294, %v299
    %v303 = vadd.f32 %v40, %v301
    %v304 = vadd.f32 %v41, %v302
    %v305 = vld [vmem:[%s9] sm:$0x1]
    %v306 = vld [vmem:[%s10] sm:$0x1]
    %v307 = vsel %vm44, %v303, 0.0
    %308 = vadd.xlane.f32.xlu0 %v307
    %v309 = vpop.xlane.xlu0 %308
    %v310 = vsel %vm44, %v304, 0.0
    %311 = vadd.xlane.f32.xlu0 %v310
    %v312 = vpop.xlane.xlu0 %311
    %v313 = vmul.f32 %v309, %v51
    %v314 = vmul.f32 %v312, %v51
    %v315 = vsub.f32 %v303, %v313
    %v316 = vsub.f32 %v304, %v314
    %v317 = vmul.f32 %v315, %v315
    %v318 = vmul.f32 %v316, %v316
    %v319 = vsel %vm44, %v317, 0.0
    %320 = vadd.xlane.f32.xlu0 %v319
    %v321 = vpop.xlane.xlu0 %320
    %v322 = vsel %vm44, %v318, 0.0
    %323 = vadd.xlane.f32.xlu0 %v322
    %v324 = vpop.xlane.xlu0 %323
    %v325 = vmul.f32 %v321, %v51
    %v326 = vmul.f32 %v324, %v51
    %v327 = vadd.f32 %v325, 1e-05
    %v328 = vadd.f32 %v326, 1e-05
    %v329 = vrsqrt.pop %v327
    %v330 = vrsqrt.pop %v328
    %v331 = vmul.f32 %v315, %v329
    %v332 = vmul.f32 %v316, %v330
    %v334 = vlaneseq
    %v335 = vshrl.u32 %v334, 7
    %v336 = vsub.s32 0, %v335
    %v337 = vrot.slane %v305, %v336
    %v339 = vmul.f32 %v331, %v337
    %v340 = vmul.f32 %v332, %v337
    %v342 = vlaneseq
    %v343 = vshrl.u32 %v342, 7
    %v344 = vsub.s32 0, %v343
    %v345 = vrot.slane %v306, %v344
    %v347 = vadd.f32 %v339, %v345
    %v348 = vadd.f32 %v340, %v345
    %349 = vst.msk [vmem:[#allocation2] sm:$0xff] %vm44, %v347
    %350 = vst.msk [vmem:[#allocation2 + $0x8] sm:$0xff] %vm44, %v348
    // Predicated region
    $region46: #{tpu_custom_call.1} parent=1 // pred_check
      _
    $region47: #{tpu_custom_call.1} parent=1 // pred_check_branch
      %352 = sbr.rel (0) target = $region49
    $region48: #{tpu_custom_call.1} parent=1 // pred_region
      %s354 = ssub.s32 256, 256
      %355 = vsyncadd [#allocation3], %s354
      %s356 = sshll.u32 [#allocation2], 4
      %s357 = int_to_ptr.vmem [resolvable:$true] %s356
      %362 = dma.vmem_to_hbm [thread:$0]  %s357, 256, %s11, [#allocation3], 128, 128, 8
    $region49: #{tpu_custom_call.1} parent=1 // pred_fallthru
      _
    // Predicated region
    $region50: #{tpu_custom_call.1} parent=1 // pred_check
      _
    $region51: #{tpu_custom_call.1} parent=1 // pred_check_branch
      %364 = sbr.rel (0) target = $region53
    $region52: #{tpu_custom_call.1} parent=1 // pred_region
      %365 = dma.done [#allocation3], 256
    $region53: #{tpu_custom_call.1} parent=1 // pred_fallthru
      _
    %366 = vsyncpa [#allocation3], 1

</llo_original>
